<compile_context>
chip_gen: v7x
topology: tpu7x:2x2x1
jax: 0.10.0
libtpu: 0.0.40
codegen_flags: <defaults>
</compile_context>

<pallas_src>
import functools

import jax
import jax.numpy as jnp
from jax.experimental import pallas as pl
from jax.experimental.pallas import tpu as pltpu


# ---------------------------------------------------------------------------
# Pallas kernel: per-batch-sample complex channel mixing over retained modes.
#   xr/xi : (1, Cin,  L)   real / imag parts of the packed Fourier modes
#   wr/wi : (Cin, Cout, L) real / imag parts of the packed weights (w1 ++ w2)
#   or/oi : (1, Cout, L)   mixed output modes
#   out[o, l] = sum_i x[i, l] * w[i, o, l]   (complex, elementwise over l)
# ---------------------------------------------------------------------------
def _spectral_mix_kernel(xr_ref, xi_ref, wr_ref, wi_ref, or_ref, oi_ref,
                         *, cin, cout, lanes):
    xr = xr_ref[0]                      # (cin, lanes)
    xi = xi_ref[0]
    wr = wr_ref[...]                    # (cin, cout, lanes)
    wi = wi_ref[...]

    acc_r = jnp.zeros((cout, lanes), jnp.float32)
    acc_i = jnp.zeros((cout, lanes), jnp.float32)
    # Unrolled VPU complex multiply-accumulate over input channels.
    for i in range(cin):
        ar = xr[i:i + 1]                # (1, lanes) -> broadcasts over cout sublanes
        ai = xi[i:i + 1]
        br = wr[i]                      # (cout, lanes)
        bi = wi[i]
        acc_r = acc_r + (ar * br - ai * bi)
        acc_i = acc_i + (ar * bi + ai * br)

    or_ref[0] = acc_r
    oi_ref[0] = acc_i


def _spectral_mix(xr, xi, wr, wi):
    """xr/xi: (B, Cin, L); wr/wi: (Cin, Cout, L) -> (B, Cout, L) re/im."""
    B, Cin, L = xr.shape
    Cout = wr.shape[1]
    kernel = functools.partial(_spectral_mix_kernel, cin=Cin, cout=Cout, lanes=L)
    return pl.pallas_call(
        kernel,
        out_shape=(jax.ShapeDtypeStruct((B, Cout, L), jnp.float32),
                   jax.ShapeDtypeStruct((B, Cout, L), jnp.float32)),
        grid=(B,),
        in_specs=[
            pl.BlockSpec((1, Cin, L), lambda b: (b, 0, 0)),
            pl.BlockSpec((1, Cin, L), lambda b: (b, 0, 0)),
            pl.BlockSpec((Cin, Cout, L), lambda b: (0, 0, 0)),
            pl.BlockSpec((Cin, Cout, L), lambda b: (0, 0, 0)),
        ],
        out_specs=(
            pl.BlockSpec((1, Cout, L), lambda b: (b, 0, 0)),
            pl.BlockSpec((1, Cout, L), lambda b: (b, 0, 0)),
        ),
        compiler_params=pltpu.CompilerParams(
            dimension_semantics=("parallel",)),
    )(xr, xi, wr, wi)


# ---------------------------------------------------------------------------
# Full SpectralConv2d forward (FFT / inverse FFT in JAX, mixing in Pallas).
#   x  : (B, Cin, H, W) float32
#   w1 : (Cin, Cout, m1, m2, 2) float32   (last dim = (real, imag))
#   w2 : (Cin, Cout, m1, m2, 2) float32
# ---------------------------------------------------------------------------
def spectral_conv2d(x, w1, w2, modes1, modes2):
    B, Cin, H, W = x.shape
    Cout = w1.shape[1]
    Wf = W // 2 + 1
    L = 2 * modes1 * modes2

    # TODO(synk): FFT has no Pallas equivalent; use XLA's FFT here.
    x_ft = jnp.fft.rfft2(x)                                   # (B, Cin, H, Wf) c64

    # Pack the two retained mode slabs (low / high frequency rows) into one
    # lane-dense slab of width L = 2*m1*m2.
    top = x_ft[:, :, :modes1, :modes2]                        # (B, Cin, m1, m2)
    bot = x_ft[:, :, H - modes1:, :modes2]                    # (B, Cin, m1, m2)
    xm = jnp.concatenate([top, bot], axis=2).reshape(B, Cin, L)
    xr = jnp.real(xm).astype(jnp.float32)
    xi = jnp.imag(xm).astype(jnp.float32)

    wc = jnp.concatenate([w1, w2], axis=2).reshape(Cin, Cout, L, 2)
    wr = wc[..., 0]
    wi = wc[..., 1]

    out_r, out_i = _spectral_mix(xr, xi, wr, wi)              # (B, Cout, L) each

    out_m = (out_r + 1j * out_i).astype(jnp.complex64)
    out_m = out_m.reshape(B, Cout, 2 * modes1, modes2)

    out_ft = jnp.zeros((B, Cout, H, Wf), jnp.complex64)
    out_ft = out_ft.at[:, :, :modes1, :modes2].set(out_m[:, :, :modes1, :])
    out_ft = out_ft.at[:, :, H - modes1:, :modes2].set(out_m[:, :, modes1:, :])

    # TODO(synk): inverse FFT also stays in XLA.
    return jnp.fft.irfft2(out_ft, s=(H, W)).astype(jnp.float32)


# ---------------------------------------------------------------------------
# Pure-JAX reference (mirrors the PyTorch module) for correctness check.
# ---------------------------------------------------------------------------
def _ref_spectral_conv2d(x, w1, w2, modes1, modes2):
    B, Cin, H, W = x.shape
    Cout = w1.shape[1]
    Wf = W // 2 + 1
    x_ft = jnp.fft.rfft2(x)
    w1c = w1[..., 0] + 1j * w1[..., 1]
    w2c = w2[..., 0] + 1j * w2[..., 1]
    out_ft = jnp.zeros((B, Cout, H, Wf), jnp.complex64)
    out_ft = out_ft.at[:, :, :modes1, :modes2].set(
        jnp.einsum('bixy,ioxy->boxy', x_ft[:, :, :modes1, :modes2], w1c))
    out_ft = out_ft.at[:, :, H - modes1:, :modes2].set(
        jnp.einsum('bixy,ioxy->boxy', x_ft[:, :, -modes1:, :modes2], w2c))
    return jnp.fft.irfft2(out_ft, s=(H, W)).astype(jnp.float32)


if __name__ == "__main__":
    B, Cin, Cout, H, W = 2, 4, 4, 16, 16
    M1 = M2 = 8                      # 2 * M1 * M2 = 128 lanes (lane-dense)

    key = jax.random.PRNGKey(0)
    kx, k1, k2 = jax.random.split(key, 3)
    x = jax.random.normal(kx, (B, Cin, H, W), jnp.float32)
    scale = 1.0 / (Cin * Cout)
    w1 = scale * jax.random.uniform(k1, (Cin, Cout, M1, M2, 2), jnp.float32)
    w2 = scale * jax.random.uniform(k2, (Cin, Cout, M1, M2, 2), jnp.float32)

    out = jax.block_until_ready(spectral_conv2d(x, w1, w2, M1, M2))
    ref = jax.block_until_ready(_ref_spectral_conv2d(x, w1, w2, M1, M2))

    assert out.shape == (B, Cout, H, W) and out.dtype == jnp.float32
    assert jnp.allclose(out, ref, atol=1e-4, rtol=1e-4), \
        f"max abs err = {jnp.max(jnp.abs(out - ref))}"
    print("KERNEL_OK")
</pallas_src>

<mosaic_0001>
module attributes {stable_mosaic.version = 11 : i64} {
  func.func @_spectral_mix_kernel(%arg0: i32, %arg1: memref<1x4x128xf32, #tpu.memory_space<vmem>>, %arg2: memref<1x4x128xf32, #tpu.memory_space<vmem>>, %arg3: memref<4x4x128xf32, #tpu.memory_space<vmem>>, %arg4: memref<4x4x128xf32, #tpu.memory_space<vmem>>, %arg5: memref<1x4x128xf32, #tpu.memory_space<vmem>>, %arg6: memref<1x4x128xf32, #tpu.memory_space<vmem>>) attributes {dimension_semantics = [#tpu.dimension_semantics<parallel>], iteration_bounds = array<i64: 2>, scalar_prefetch = 0 : i64, scratch_operands = 0 : i64, tpu.core_type = #tpu.core_type<tc>, window_params = [{transform_indices = @transform_0, window_bounds = array<i64: 1, 4, 128>}, {transform_indices = @transform_1, window_bounds = array<i64: 1, 4, 128>}, {pipeline_mode = #tpu.pipeline_mode<synchronous>, transform_indices = @transform_2, window_bounds = array<i64: 4, 4, 128>}, {pipeline_mode = #tpu.pipeline_mode<synchronous>, transform_indices = @transform_3, window_bounds = array<i64: 4, 4, 128>}, {transform_indices = @transform_4, window_bounds = array<i64: 1, 4, 128>}, {transform_indices = @transform_5, window_bounds = array<i64: 1, 4, 128>}]} {
    %c0 = arith.constant 0 : index
    %c0_0 = arith.constant 0 : index
    %c0_1 = arith.constant 0 : index
    %0 = vector.load %arg1[%c0, %c0_0, %c0_1] : memref<1x4x128xf32, #tpu.memory_space<vmem>>, vector<1x4x128xf32>
    %1 = vector.shape_cast %0 : vector<1x4x128xf32> to vector<4x128xf32>
    %c0_2 = arith.constant 0 : index
    %c0_3 = arith.constant 0 : index
    %c0_4 = arith.constant 0 : index
    %2 = vector.load %arg2[%c0_2, %c0_3, %c0_4] : memref<1x4x128xf32, #tpu.memory_space<vmem>>, vector<1x4x128xf32>
    %3 = vector.shape_cast %2 : vector<1x4x128xf32> to vector<4x128xf32>
    %c0_5 = arith.constant 0 : index
    %c0_6 = arith.constant 0 : index
    %c0_7 = arith.constant 0 : index
    %4 = vector.load %arg3[%c0_5, %c0_6, %c0_7] : memref<4x4x128xf32, #tpu.memory_space<vmem>>, vector<4x4x128xf32>
    %c0_8 = arith.constant 0 : index
    %c0_9 = arith.constant 0 : index
    %c0_10 = arith.constant 0 : index
    %5 = vector.load %arg4[%c0_8, %c0_9, %c0_10] : memref<4x4x128xf32, #tpu.memory_space<vmem>>, vector<4x4x128xf32>
    %cst = arith.constant 0.000000e+00 : f32
    %6 = vector.broadcast %cst : f32 to vector<4x128xf32>
    %cst_11 = arith.constant 0.000000e+00 : f32
    %7 = vector.broadcast %cst_11 : f32 to vector<4x128xf32>
    %8 = vector.extract_strided_slice %1 {offsets = [0, 0], sizes = [1, 128], strides = [1, 1]} : vector<4x128xf32> to vector<1x128xf32>
    %9 = vector.extract_strided_slice %3 {offsets = [0, 0], sizes = [1, 128], strides = [1, 1]} : vector<4x128xf32> to vector<1x128xf32>
    %10 = vector.extract_strided_slice %4 {offsets = [0, 0, 0], sizes = [1, 4, 128], strides = [1, 1, 1]} : vector<4x4x128xf32> to vector<1x4x128xf32>
    %11 = vector.shape_cast %10 : vector<1x4x128xf32> to vector<4x128xf32>
    %12 = vector.extract_strided_slice %5 {offsets = [0, 0, 0], sizes = [1, 4, 128], strides = [1, 1, 1]} : vector<4x4x128xf32> to vector<1x4x128xf32>
    %13 = vector.shape_cast %12 : vector<1x4x128xf32> to vector<4x128xf32>
    %14 = vector.broadcast %8 : vector<1x128xf32> to vector<4x128xf32>
    %15 = arith.mulf %14, %11 : vector<4x128xf32>
    %16 = vector.broadcast %9 : vector<1x128xf32> to vector<4x128xf32>
    %17 = arith.mulf %16, %13 : vector<4x128xf32>
    %18 = arith.subf %15, %17 : vector<4x128xf32>
    %19 = arith.addf %6, %18 : vector<4x128xf32>
    %20 = vector.broadcast %8 : vector<1x128xf32> to vector<4x128xf32>
    %21 = arith.mulf %20, %13 : vector<4x128xf32>
    %22 = vector.broadcast %9 : vector<1x128xf32> to vector<4x128xf32>
    %23 = arith.mulf %22, %11 : vector<4x128xf32>
    %24 = arith.addf %21, %23 : vector<4x128xf32>
    %25 = arith.addf %7, %24 : vector<4x128xf32>
    %26 = vector.extract_strided_slice %1 {offsets = [1, 0], sizes = [1, 128], strides = [1, 1]} : vector<4x128xf32> to vector<1x128xf32>
    %27 = vector.extract_strided_slice %3 {offsets = [1, 0], sizes = [1, 128], strides = [1, 1]} : vector<4x128xf32> to vector<1x128xf32>
    %28 = vector.extract_strided_slice %4 {offsets = [1, 0, 0], sizes = [1, 4, 128], strides = [1, 1, 1]} : vector<4x4x128xf32> to vector<1x4x128xf32>
    %29 = vector.shape_cast %28 : vector<1x4x128xf32> to vector<4x128xf32>
    %30 = vector.extract_strided_slice %5 {offsets = [1, 0, 0], sizes = [1, 4, 128], strides = [1, 1, 1]} : vector<4x4x128xf32> to vector<1x4x128xf32>
    %31 = vector.shape_cast %30 : vector<1x4x128xf32> to vector<4x128xf32>
    %32 = vector.broadcast %26 : vector<1x128xf32> to vector<4x128xf32>
    %33 = arith.mulf %32, %29 : vector<4x128xf32>
    %34 = vector.broadcast %27 : vector<1x128xf32> to vector<4x128xf32>
    %35 = arith.mulf %34, %31 : vector<4x128xf32>
    %36 = arith.subf %33, %35 : vector<4x128xf32>
    %37 = arith.addf %19, %36 : vector<4x128xf32>
    %38 = vector.broadcast %26 : vector<1x128xf32> to vector<4x128xf32>
    %39 = arith.mulf %38, %31 : vector<4x128xf32>
    %40 = vector.broadcast %27 : vector<1x128xf32> to vector<4x128xf32>
    %41 = arith.mulf %40, %29 : vector<4x128xf32>
    %42 = arith.addf %39, %41 : vector<4x128xf32>
    %43 = arith.addf %25, %42 : vector<4x128xf32>
    %44 = vector.extract_strided_slice %1 {offsets = [2, 0], sizes = [1, 128], strides = [1, 1]} : vector<4x128xf32> to vector<1x128xf32>
    %45 = vector.extract_strided_slice %3 {offsets = [2, 0], sizes = [1, 128], strides = [1, 1]} : vector<4x128xf32> to vector<1x128xf32>
    %46 = vector.extract_strided_slice %4 {offsets = [2, 0, 0], sizes = [1, 4, 128], strides = [1, 1, 1]} : vector<4x4x128xf32> to vector<1x4x128xf32>
    %47 = vector.shape_cast %46 : vector<1x4x128xf32> to vector<4x128xf32>
    %48 = vector.extract_strided_slice %5 {offsets = [2, 0, 0], sizes = [1, 4, 128], strides = [1, 1, 1]} : vector<4x4x128xf32> to vector<1x4x128xf32>
    %49 = vector.shape_cast %48 : vector<1x4x128xf32> to vector<4x128xf32>
    %50 = vector.broadcast %44 : vector<1x128xf32> to vector<4x128xf32>
    %51 = arith.mulf %50, %47 : vector<4x128xf32>
    %52 = vector.broadcast %45 : vector<1x128xf32> to vector<4x128xf32>
    %53 = arith.mulf %52, %49 : vector<4x128xf32>
    %54 = arith.subf %51, %53 : vector<4x128xf32>
    %55 = arith.addf %37, %54 : vector<4x128xf32>
    %56 = vector.broadcast %44 : vector<1x128xf32> to vector<4x128xf32>
    %57 = arith.mulf %56, %49 : vector<4x128xf32>
    %58 = vector.broadcast %45 : vector<1x128xf32> to vector<4x128xf32>
    %59 = arith.mulf %58, %47 : vector<4x128xf32>
    %60 = arith.addf %57, %59 : vector<4x128xf32>
    %61 = arith.addf %43, %60 : vector<4x128xf32>
    %62 = vector.extract_strided_slice %1 {offsets = [3, 0], sizes = [1, 128], strides = [1, 1]} : vector<4x128xf32> to vector<1x128xf32>
    %63 = vector.extract_strided_slice %3 {offsets = [3, 0], sizes = [1, 128], strides = [1, 1]} : vector<4x128xf32> to vector<1x128xf32>
    %64 = vector.extract_strided_slice %4 {offsets = [3, 0, 0], sizes = [1, 4, 128], strides = [1, 1, 1]} : vector<4x4x128xf32> to vector<1x4x128xf32>
    %65 = vector.shape_cast %64 : vector<1x4x128xf32> to vector<4x128xf32>
    %66 = vector.extract_strided_slice %5 {offsets = [3, 0, 0], sizes = [1, 4, 128], strides = [1, 1, 1]} : vector<4x4x128xf32> to vector<1x4x128xf32>
    %67 = vector.shape_cast %66 : vector<1x4x128xf32> to vector<4x128xf32>
    %68 = vector.broadcast %62 : vector<1x128xf32> to vector<4x128xf32>
    %69 = arith.mulf %68, %65 : vector<4x128xf32>
    %70 = vector.broadcast %63 : vector<1x128xf32> to vector<4x128xf32>
    %71 = arith.mulf %70, %67 : vector<4x128xf32>
    %72 = arith.subf %69, %71 : vector<4x128xf32>
    %73 = arith.addf %55, %72 : vector<4x128xf32>
    %74 = vector.broadcast %62 : vector<1x128xf32> to vector<4x128xf32>
    %75 = arith.mulf %74, %67 : vector<4x128xf32>
    %76 = vector.broadcast %63 : vector<1x128xf32> to vector<4x128xf32>
    %77 = arith.mulf %76, %65 : vector<4x128xf32>
    %78 = arith.addf %75, %77 : vector<4x128xf32>
    %79 = arith.addf %61, %78 : vector<4x128xf32>
    %c0_12 = arith.constant 0 : index
    %c0_13 = arith.constant 0 : index
    %c0_14 = arith.constant 0 : index
    %80 = vector.load %arg5[%c0_12, %c0_13, %c0_14] : memref<1x4x128xf32, #tpu.memory_space<vmem>>, vector<1x4x128xf32>
    %81 = vector.shape_cast %80 : vector<1x4x128xf32> to vector<4x128xf32>
    %82 = vector.shape_cast %73 : vector<4x128xf32> to vector<1x4x128xf32>
    tpu.vector_store %arg5[%c0_12, %c0_13, %c0_14], %82 {strides = array<i32>} : memref<1x4x128xf32, #tpu.memory_space<vmem>>, vector<1x4x128xf32>,
    %c0_15 = arith.constant 0 : index
    %c0_16 = arith.constant 0 : index
    %c0_17 = arith.constant 0 : index
    %83 = vector.load %arg6[%c0_15, %c0_16, %c0_17] : memref<1x4x128xf32, #tpu.memory_space<vmem>>, vector<1x4x128xf32>
    %84 = vector.shape_cast %83 : vector<1x4x128xf32> to vector<4x128xf32>
    %85 = vector.shape_cast %79 : vector<4x128xf32> to vector<1x4x128xf32>
    tpu.vector_store %arg6[%c0_15, %c0_16, %c0_17], %85 {strides = array<i32>} : memref<1x4x128xf32, #tpu.memory_space<vmem>>, vector<1x4x128xf32>,
    return
  }
  func.func @transform_0(%arg0: i32) -> (i32, i32, i32) {
    %c0_i32 = arith.constant 0 : i32
    %c0_i32_0 = arith.constant 0 : i32
    %c0_i32_1 = arith.constant 0 : i32
    return %arg0, %c0_i32, %c0_i32_0 : i32, i32, i32
  }
  func.func @transform_1(%arg0: i32) -> (i32, i32, i32) {
    %c0_i32 = arith.constant 0 : i32
    %c0_i32_0 = arith.constant 0 : i32
    %c0_i32_1 = arith.constant 0 : i32
    return %arg0, %c0_i32, %c0_i32_0 : i32, i32, i32
  }
  func.func @transform_2(%arg0: i32) -> (i32, i32, i32) {
    %c0_i32 = arith.constant 0 : i32
    %c0_i32_0 = arith.constant 0 : i32
    %c0_i32_1 = arith.constant 0 : i32
    %c0_i32_2 = arith.constant 0 : i32
    return %c0_i32, %c0_i32_0, %c0_i32_1 : i32, i32, i32
  }
  func.func @transform_3(%arg0: i32) -> (i32, i32, i32) {
    %c0_i32 = arith.constant 0 : i32
    %c0_i32_0 = arith.constant 0 : i32
    %c0_i32_1 = arith.constant 0 : i32
    %c0_i32_2 = arith.constant 0 : i32
    return %c0_i32, %c0_i32_0, %c0_i32_1 : i32, i32, i32
  }
  func.func @transform_4(%arg0: i32) -> (i32, i32, i32) {
    %c0_i32 = arith.constant 0 : i32
    %c0_i32_0 = arith.constant 0 : i32
    %c0_i32_1 = arith.constant 0 : i32
    return %arg0, %c0_i32, %c0_i32_0 : i32, i32, i32
  }
  func.func @transform_5(%arg0: i32) -> (i32, i32, i32) {
    %c0_i32 = arith.constant 0 : i32
    %c0_i32_0 = arith.constant 0 : i32
    %c0_i32_1 = arith.constant 0 : i32
    return %arg0, %c0_i32, %c0_i32_0 : i32, i32, i32
  }
}

</mosaic_0001>

<llo_original>
// kernel: tpu_custom_call.1
$region0: #{tpu_custom_call.1}
  #allocation0 [shape = 'u32[]', space=smem, size = 0x4, offset = 0x4, fixed_abs, tag = 'smem constant byte address 0x4 - core index']
  #allocation1 [shape = 'u32[144,128]{1,0:T(1,128)}', space=vmem, size = 0x12000, scoped, tag = 'internal scratch']
  %s0 = inlined_call_operand.hbm [shape: f32[2,4,128], index: 0, kind: input, shape index: {}]
  %s1 = inlined_call_operand.hbm [shape: f32[2,4,128], index: 1, kind: input, shape index: {}]
  %s2 = inlined_call_operand.hbm [shape: f32[4,4,128], index: 2, kind: input, shape index: {}]
  %s3 = inlined_call_operand.hbm [shape: f32[4,4,128], index: 3, kind: input, shape index: {}]
  %s4 = inlined_call_operand.hbm [shape: f32[2,4,128], index: 4, kind: output, shape index: {0}]
  %s5 = inlined_call_operand.hbm [shape: f32[2,4,128], index: 5, kind: output, shape index: {1}]
  %6 = xla_tuple %s4, %s5
  %s7 = sld [smem:[#allocation0]]
  $region73: #{tpu_custom_call.1} parent=0
    _
  %s9 = ssub.s32 1, %s7
  %s10 = scalar_select 0, %s9, %s7
  $region1: #{tpu_custom_call.1} parent=0
    #allocation2 [shape = 'u8[4096]{0}', space=vmem, size = 0x1000, scoped, tag = 'input window, operand 0']
    #allocation3 [shape = 's32[2]{0}', space=sflag, size = 0x8, scoped, tag = 'scoped memory for tpu_custom_call.1']
    #allocation4 [shape = 's32[2]{0}', space=sflag, size = 0x8, scoped, tag = 'scoped memory for tpu_custom_call.1']
    #allocation5 [shape = 'u8[4096]{0}', space=vmem, size = 0x1000, scoped, tag = 'input window, operand 1']
    #allocation6 [shape = 's32[2]{0}', space=sflag, size = 0x8, scoped, tag = 'scoped memory for tpu_custom_call.1']
    #allocation7 [shape = 'u8[8192]{0}', space=vmem, size = 0x2000, scoped, tag = 'input window, operand 2, single buffered']
    #allocation8 [shape = 'u8[8192]{0}', space=vmem, size = 0x2000, scoped, tag = 'input window, operand 3, single buffered']
    #allocation9 [shape = 's32[1]{0}', space=sflag, size = 0x4, scoped, tag = 'scoped memory for tpu_custom_call.1']
    #allocation10 [shape = 'u8[4096]{0}', space=vmem, size = 0x1000, scoped, tag = 'output window, operand 0']
    #allocation11 [shape = 'u8[4096]{0}', space=vmem, size = 0x1000, scoped, tag = 'output window, operand 1']
    #allocation12 [shape = 's32[2]{0}', space=sflag, size = 0x8, scoped, tag = 'scoped memory for tpu_custom_call.1']
    %11 = vsyncpa [#allocation3], 0
    %s12 = scalar_lea.sflag [#allocation3], 1
    %13 = vsyncpa %s12, 0
    %14 = vsyncpa [#allocation6], 0
    %s15 = scalar_lea.sflag [#allocation6], 1
    %16 = vsyncpa %s15, 0
    %17 = vsyncpa [#allocation9], 0
    %18 = vsyncpa [#allocation4], 0
    %s19 = scalar_lea.sflag [#allocation4], 1
    %20 = vsyncpa %s19, 0
    %21 = vsyncpa [#allocation12], 0
    %s22 = scalar_lea.sflag [#allocation12], 1
    %23 = vsyncpa %s22, 0
    loop: start=0, step=1, limit=4
    $region2: #{tpu_custom_call.1} parent=1 // loop_pre_header
      _
    $region3: #{tpu_custom_call.1} parent=1 // loop_header
      %s25 = sphi 0, %s29
      %p26 = scmp.ge.s32.totalorder %s25, 4
      %s35 = sphi 0, %s37
      %s38 = sphi 0, %s35
      %s39 = sphi 0, %s38
      %s55 = sphi 0, %s39
      %s61 = sphi 0, %s63
      %s64 = sphi 0, %s61
      %s65 = sphi 0, %s64
      %s81 = sphi 0, %s65
      %s85 = sphi 0, %s85
      %s87 = sphi 0, %s85
      %s88 = sphi 0, %s87
      %s102 = sphi 0, %s88
      %s106 = sphi 0, %s106
      %s108 = sphi 0, %s106
      %s109 = sphi 0, %s108
      %s123 = sphi 0, %s109
      %s129 = sphi 0, %s131
      %s132 = sphi 0, %s129
      %s133 = sphi 0, %s132
      %s149 = sphi 0, %s133
      %s155 = sphi 0, %s157
      %s158 = sphi 0, %s155
      %s159 = sphi 0, %s158
      %s175 = sphi 0, %s159
    $region4: #{tpu_custom_call.1} parent=1 // loop_header_branch
      %28 = sbr.rel (%p26) target = $region8
    $region5: #{tpu_custom_call.1} parent=1 // loop_body
      %s30 = ssub.s32 %s25, 1
      %s31 = ssub.s32 %s25, 2
      %s32 = sadd.s32 %s25, 1
      %s33 = ssub.s32 %s25, %s32
      %p34 = scmp.eq.s32.totalorder %s33, 0
      %s36 = sadd.s32 %s35, 1
      %s37 = scalar_select %p34, %s35, %s36
      %p40 = pneg %p34
      %p41 = scmp.eq.s32.totalorder %s25, 1
      %p42 = por %p40, %p41
      %p43 = scmp.ne.s32.totalorder %s35, %s38
      %p44 = scmp.eq.s32.totalorder %s25, 0
      %p45 = por %p43, %p44
      %p46 = scmp.ne.s32.totalorder %s35, %s38
      %p47 = scmp.eq.s32.totalorder %s30, 1
      %p48 = por %p46, %p47
      %p49 = scmp.ne.s32.totalorder %s38, %s39
      %p50 = scmp.eq.s32.totalorder %s30, 0
      %p51 = por %p49, %p50
      %p52 = scmp.ne.s32.totalorder %s38, %s39
      %p53 = scmp.eq.s32.totalorder %s31, 1
      %p54 = por %p52, %p53
      %p56 = scmp.ne.s32.totalorder %s39, %s55
      %p57 = scmp.eq.s32.totalorder %s31, 0
      %p58 = por %p56, %p57
      %s59 = ssub.s32 %s25, %s32
      %p60 = scmp.eq.s32.totalorder %s59, 0
      %s62 = sadd.s32 %s61, 1
      %s63 = scalar_select %p60, %s61, %s62
      %p66 = pneg %p60
      %p67 = scmp.eq.s32.totalorder %s25, 1
      %p68 = por %p66, %p67
      %p69 = scmp.ne.s32.totalorder %s61, %s64
      %p70 = scmp.eq.s32.totalorder %s25, 0
      %p71 = por %p69, %p70
      %p72 = scmp.ne.s32.totalorder %s61, %s64
      %p73 = scmp.eq.s32.totalorder %s30, 1
      %p74 = por %p72, %p73
      %p75 = scmp.ne.s32.totalorder %s64, %s65
      %p76 = scmp.eq.s32.totalorder %s30, 0
      %p77 = por %p75, %p76
      %p78 = scmp.ne.s32.totalorder %s64, %s65
      %p79 = scmp.eq.s32.totalorder %s31, 1
      %p80 = por %p78, %p79
      %p82 = scmp.ne.s32.totalorder %s65, %s81
      %p83 = scmp.eq.s32.totalorder %s31, 0
      %p84 = por %p82, %p83
      %s86 = sadd.s32 %s85, 1
      %p89 = scmp.eq.s32.totalorder %s25, 1
      %p90 = scmp.ne.s32.totalorder %s85, %s87
      %p91 = scmp.eq.s32.totalorder %s25, 0
      %p92 = por %p90, %p91
      %p93 = scmp.ne.s32.totalorder %s85, %s87
      %p94 = scmp.eq.s32.totalorder %s30, 1
      %p95 = por %p93, %p94
      %p96 = scmp.ne.s32.totalorder %s87, %s88
      %p97 = scmp.eq.s32.totalorder %s30, 0
      %p98 = por %p96, %p97
      %p99 = scmp.ne.s32.totalorder %s87, %s88
      %p100 = scmp.eq.s32.totalorder %s31, 1
      %p101 = por %p99, %p100
      %p103 = scmp.ne.s32.totalorder %s88, %s102
      %p104 = scmp.eq.s32.totalorder %s31, 0
      %p105 = por %p103, %p104
      %s107 = sadd.s32 %s106, 1
      %p110 = scmp.eq.s32.totalorder %s25, 1
      %p111 = scmp.ne.s32.totalorder %s106, %s108
      %p112 = scmp.eq.s32.totalorder %s25, 0
      %p113 = por %p111, %p112
      %p114 = scmp.ne.s32.totalorder %s106, %s108
      %p115 = scmp.eq.s32.totalorder %s30, 1
      %p116 = por %p114, %p115
      %p117 = scmp.ne.s32.totalorder %s108, %s109
      %p118 = scmp.eq.s32.totalorder %s30, 0
      %p119 = por %p117, %p118
      %p120 = scmp.ne.s32.totalorder %s108, %s109
      %p121 = scmp.eq.s32.totalorder %s31, 1
      %p122 = por %p120, %p121
      %p124 = scmp.ne.s32.totalorder %s109, %s123
      %p125 = scmp.eq.s32.totalorder %s31, 0
      %p126 = por %p124, %p125
      %s127 = ssub.s32 %s25, %s32
      %p128 = scmp.eq.s32.totalorder %s127, 0
      %s130 = sadd.s32 %s129, 1
      %s131 = scalar_select %p128, %s129, %s130
      %p134 = pneg %p128
      %p135 = scmp.eq.s32.totalorder %s25, 1
      %p136 = por %p134, %p135
      %p137 = scmp.ne.s32.totalorder %s129, %s132
      %p138 = scmp.eq.s32.totalorder %s25, 0
      %p139 = por %p137, %p138
      %p140 = scmp.ne.s32.totalorder %s129, %s132
      %p141 = scmp.eq.s32.totalorder %s30, 1
      %p142 = por %p140, %p141
      %p143 = scmp.ne.s32.totalorder %s132, %s133
      %p144 = scmp.eq.s32.totalorder %s30, 0
      %p145 = por %p143, %p144
      %p146 = scmp.ne.s32.totalorder %s132, %s133
      %p147 = scmp.eq.s32.totalorder %s31, 1
      %p148 = por %p146, %p147
      %p150 = scmp.ne.s32.totalorder %s133, %s149
      %p151 = scmp.eq.s32.totalorder %s31, 0
      %p152 = por %p150, %p151
      %s153 = ssub.s32 %s25, %s32
      %p154 = scmp.eq.s32.totalorder %s153, 0
      %s156 = sadd.s32 %s155, 1
      %s157 = scalar_select %p154, %s155, %s156
      %p160 = pneg %p154
      %p161 = scmp.eq.s32.totalorder %s25, 1
      %p162 = por %p160, %p161
      %p163 = scmp.ne.s32.totalorder %s155, %s158
      %p164 = scmp.eq.s32.totalorder %s25, 0
      %p165 = por %p163, %p164
      %p166 = scmp.ne.s32.totalorder %s155, %s158
      %p167 = scmp.eq.s32.totalorder %s30, 1
      %p168 = por %p166, %p167
      %p169 = scmp.ne.s32.totalorder %s158, %s159
      %p170 = scmp.eq.s32.totalorder %s30, 0
      %p171 = por %p169, %p170
      %p172 = scmp.ne.s32.totalorder %s158, %s159
      %p173 = scmp.eq.s32.totalorder %s31, 1
      %p174 = por %p172, %p173
      %p176 = scmp.ne.s32.totalorder %s159, %s175
      %p177 = scmp.eq.s32.totalorder %s31, 0
      %p178 = por %p176, %p177
      %p179 = scmp.le.s32.totalorder 1, %s25
      %p180 = scmp.lt.s32.totalorder %s25, 3
      %p181 = pnand %p179, %p180
      %p182 = pneg %p181
      // Predicated region
      $region9: #{tpu_custom_call.1} parent=5 // pred_check
        _
      $region10: #{tpu_custom_call.1} parent=5 // pred_check_branch
        %184 = sbr.rel (%p181) target = $region12
      $region11: #{tpu_custom_call.1} parent=5 // pred_region
        %s185 = ssub.s32 %s25, 1
        // Predicated region
        $region13: #{tpu_custom_call.1} parent=11 // pred_check
          %p186 = pneg %p98
        $region14: #{tpu_custom_call.1} parent=11 // pred_check_branch
          %188 = sbr.rel (%p186) target = $region16
        $region15: #{tpu_custom_call.1} parent=11 // pred_region
          %s190 = ssub.s32 256, 256
          %191 = vsyncadd [#allocation6], %s190
          %s192 = sshll.u32 [#allocation7], 4
          %s193 = int_to_ptr.vmem [resolvable:$true] %s192
          %198 = dma.hbm_to_vmem [thread:$0]  %s2, 256, %s193, [#allocation6], 64, 64, 4
        $region16: #{tpu_custom_call.1} parent=11 // pred_fallthru
          _
        // Predicated region
        $region17: #{tpu_custom_call.1} parent=11 // pred_check
          %p199 = pneg %p119
        $region18: #{tpu_custom_call.1} parent=11 // pred_check_branch
          %201 = sbr.rel (%p199) target = $region20
        $region19: #{tpu_custom_call.1} parent=11 // pred_region
          %s203 = ssub.s32 256, 256
          %204 = vsyncadd [#allocation9], %s203
          %s205 = sshll.u32 [#allocation8], 4
          %s206 = int_to_ptr.vmem [resolvable:$true] %s205
          %211 = dma.hbm_to_vmem [thread:$0]  %s3, 256, %s206, [#allocation9], 64, 64, 4
        $region20: #{tpu_custom_call.1} parent=11 // pred_fallthru
          _
      $region12: #{tpu_custom_call.1} parent=5 // pred_fallthru
        _
      %p212 = scmp.lt.s32.totalorder %s25, 2
      // Predicated region
      $region21: #{tpu_custom_call.1} parent=5 // pred_check
        %p213 = pneg %p212
      $region22: #{tpu_custom_call.1} parent=5 // pred_check_branch
        %215 = sbr.rel (%p213) target = $region24
      $region23: #{tpu_custom_call.1} parent=5 // pred_region
        // Predicated region
        $region25: #{tpu_custom_call.1} parent=23 // pred_check
          %p216 = pneg %p45
        $region26: #{tpu_custom_call.1} parent=23 // pred_check_branch
          %218 = sbr.rel (%p216) target = $region28
        $region27: #{tpu_custom_call.1} parent=23 // pred_region
          %s219 = sand.u32 %s35, 1
          %s220 = scalar_lea.sflag [#allocation3], %s219
          %s221 = sand.u32 %s35, 1
          %s222 = smul.addr %s221, 4
          %s223 = scalar_lea.vmem [#allocation2], %s222
          %s225 = ssub.s32 64, 64
          %226 = vsyncadd %s220, %s225
          %s227 = smul.addr %s25, 64
          %s228 = scalar_lea.hbm %s0, %s227
          %s230 = sshll.u32 %s223, 4
          %s231 = int_to_ptr.vmem [resolvable:$true] %s230
          %233 = dma.hbm_to_vmem [thread:$0]  %s228, 64, %s231, %s220
        $region28: #{tpu_custom_call.1} parent=23 // pred_fallthru
          _
        // Predicated region
        $region29: #{tpu_custom_call.1} parent=23 // pred_check
          %p234 = pneg %p71
        $region30: #{tpu_custom_call.1} parent=23 // pred_check_branch
          %236 = sbr.rel (%p234) target = $region32
        $region31: #{tpu_custom_call.1} parent=23 // pred_region
          %s237 = sand.u32 %s25, 1
          %s238 = scalar_lea.sflag [#allocation6], %s237
          %s239 = sand.u32 %s61, 1
          %s240 = smul.addr %s239, 4
          %s241 = scalar_lea.vmem [#allocation5], %s240
          %s243 = ssub.s32 64, 64
          %244 = vsyncadd %s238, %s243
          %s245 = smul.addr %s25, 64
          %s246 = scalar_lea.hbm %s1, %s245
          %s248 = sshll.u32 %s241, 4
          %s249 = int_to_ptr.vmem [resolvable:$true] %s248
          %251 = dma.hbm_to_vmem [thread:$0]  %s246, 64, %s249, %s238
        $region32: #{tpu_custom_call.1} parent=23 // pred_fallthru
          _
      $region24: #{tpu_custom_call.1} parent=5 // pred_fallthru
        _
      %p252 = scmp.le.s32.totalorder 1, %s25
      %p253 = scmp.lt.s32.totalorder %s25, 3
      %p254 = pnand %p252, %p253
      %p255 = pneg %p254
      // Predicated region
      $region33: #{tpu_custom_call.1} parent=5 // pred_check
        _
      $region34: #{tpu_custom_call.1} parent=5 // pred_check_branch
        %257 = sbr.rel (%p254) target = $region36
      $region35: #{tpu_custom_call.1} parent=5 // pred_region
        %s258 = ssub.s32 %s25, 1
        %s259 = sand.u32 %s38, 1
        %s260 = scalar_lea.sflag [#allocation3], %s259
        %s261 = sand.u32 %s38, 1
        %s262 = smul.addr %s261, 4
        %s263 = scalar_lea.vmem [#allocation2], %s262
        // Predicated region
        $region37: #{tpu_custom_call.1} parent=35 // pred_check
          %p264 = pneg %p51
        $region38: #{tpu_custom_call.1} parent=35 // pred_check_branch
          %266 = sbr.rel (%p264) target = $region40
        $region39: #{tpu_custom_call.1} parent=35 // pred_region
          %267 = dma.done %s260, 64
        $region40: #{tpu_custom_call.1} parent=35 // pred_fallthru
          _
        %s268 = sand.u32 %s30, 1
        %s269 = scalar_lea.sflag [#allocation6], %s268
        %s270 = sand.u32 %s64, 1
        %s271 = smul.addr %s270, 4
        %s272 = scalar_lea.vmem [#allocation5], %s271
        // Predicated region
        $region41: #{tpu_custom_call.1} parent=35 // pred_check
          %p273 = pneg %p77
        $region42: #{tpu_custom_call.1} parent=35 // pred_check_branch
          %275 = sbr.rel (%p273) target = $region44
        $region43: #{tpu_custom_call.1} parent=35 // pred_region
          %276 = dma.done %s269, 64
        $region44: #{tpu_custom_call.1} parent=35 // pred_fallthru
          _
        // Predicated region
        $region45: #{tpu_custom_call.1} parent=35 // pred_check
          %p277 = pneg %p98
        $region46: #{tpu_custom_call.1} parent=35 // pred_check_branch
          %279 = sbr.rel (%p277) target = $region48
        $region47: #{tpu_custom_call.1} parent=35 // pred_region
          %280 = dma.done [#allocation6], 256
        $region48: #{tpu_custom_call.1} parent=35 // pred_fallthru
          _
        // Predicated region
        $region49: #{tpu_custom_call.1} parent=35 // pred_check
          %p281 = pneg %p119
        $region50: #{tpu_custom_call.1} parent=35 // pred_check_branch
          %283 = sbr.rel (%p281) target = $region52
        $region51: #{tpu_custom_call.1} parent=35 // pred_region
          %284 = dma.done [#allocation9], 256
        $region52: #{tpu_custom_call.1} parent=35 // pred_fallthru
          _
        %s285 = sand.u32 %s38, 1
        %s286 = scalar_lea.sflag [#allocation3], %s285
        %s287 = sand.u32 %s38, 1
        %s288 = smul.addr %s287, 4
        %s289 = scalar_lea.vmem [#allocation2], %s288
        %p290 = pneg %p51
        %p291 = pneg %p48
        %s292 = sand.u32 %s30, 1
        %s293 = scalar_lea.sflag [#allocation6], %s292
        %s294 = sand.u32 %s64, 1
        %s295 = smul.addr %s294, 4
        %s296 = scalar_lea.vmem [#allocation5], %s295
        %p297 = pneg %p77
        %p298 = pneg %p74
        %p299 = pneg %p98
        %p300 = pneg %p95
        %p301 = pneg %p119
        %p302 = pneg %p116
        %p303 = pneg %p145
        %p304 = pneg %p142
        %s305 = sand.u32 %s132, 1
        %s306 = scalar_lea.sflag [#allocation4], %s305
        %s307 = sand.u32 %s132, 1
        %s308 = smul.addr %s307, 4
        %s309 = scalar_lea.vmem [#allocation10], %s308
        %p310 = pneg %p171
        %p311 = pneg %p168
        %s312 = sand.u32 %s158, 1
        %s313 = scalar_lea.sflag [#allocation12], %s312
        %s314 = sand.u32 %s158, 1
        %s315 = smul.addr %s314, 4
        %s316 = scalar_lea.vmem [#allocation11], %s315
        %v317 = vld [vmem:[%s263] sm:$0xf]
        %v318 = vld [vmem:[%s272] sm:$0xf]
        %v319 = vld [vmem:[#allocation7] sm:$0xf]
        %v320 = vld [vmem:[#allocation7 + $0x4] sm:$0xf]
        %v321 = vld [vmem:[#allocation7 + $0x8] sm:$0xf]
        %v322 = vld [vmem:[#allocation7 + $0xc] sm:$0xf]
        %v323 = vld [vmem:[#allocation8] sm:$0xf]
        %v324 = vld [vmem:[#allocation8 + $0x4] sm:$0xf]
        %v325 = vld [vmem:[#allocation8 + $0x8] sm:$0xf]
        %v326 = vld [vmem:[#allocation8 + $0xc] sm:$0xf]
        %v327 = vlaneseq
        %v328 = vshrl.u32 %v327, 7
        %v329 = vsub.s32 0, %v328
        %v330 = vrot.slane %v317, %v329
        %v331 = vmul.f32 %v330, %v319
        %v332 = vlaneseq
        %v333 = vshrl.u32 %v332, 7
        %v334 = vsub.s32 0, %v333
        %v335 = vrot.slane %v318, %v334
        %v336 = vmul.f32 %v335, %v323
        %v337 = vsub.f32 %v331, %v336
        %v338 = vadd.f32 %v337, 0.0
        %v339 = vmul.f32 %v330, %v323
        %v340 = vmul.f32 %v335, %v319
        %v341 = vadd.f32 %v339, %v340
        %v342 = vadd.f32 %v341, 0.0
        %v343 = vlaneseq
        %v344 = vshrl.u32 %v343, 7
        %v345 = vsub.s32 1, %v344
        %v346 = vrot.slane %v317, %v345
        %v347 = vmul.f32 %v346, %v320
        %v348 = vlaneseq
        %v349 = vshrl.u32 %v348, 7
        %v350 = vsub.s32 1, %v349
        %v351 = vrot.slane %v318, %v350
        %v352 = vmul.f32 %v351, %v324
        %v353 = vsub.f32 %v347, %v352
        %v354 = vadd.f32 %v338, %v353
        %v355 = vmul.f32 %v346, %v324
        %v356 = vmul.f32 %v351, %v320
        %v357 = vadd.f32 %v355, %v356
        %v358 = vadd.f32 %v342, %v357
        %v359 = vlaneseq
        %v360 = vshrl.u32 %v359, 7
        %v361 = vsub.s32 2, %v360
        %v362 = vrot.slane %v317, %v361
        %v363 = vmul.f32 %v362, %v321
        %v364 = vlaneseq
        %v365 = vshrl.u32 %v364, 7
        %v366 = vsub.s32 2, %v365
        %v367 = vrot.slane %v318, %v366
        %v368 = vmul.f32 %v367, %v325
        %v369 = vsub.f32 %v363, %v368
        %v370 = vadd.f32 %v354, %v369
        %v371 = vmul.f32 %v362, %v325
        %v372 = vmul.f32 %v367, %v321
        %v373 = vadd.f32 %v371, %v372
        %v374 = vadd.f32 %v358, %v373
        %v375 = vlaneseq
        %v376 = vshrl.u32 %v375, 7
        %v377 = vsub.s32 3, %v376
        %v378 = vrot.slane %v317, %v377
        %v379 = vmul.f32 %v378, %v322
        %v380 = vlaneseq
        %v381 = vshrl.u32 %v380, 7
        %v382 = vsub.s32 3, %v381
        %v383 = vrot.slane %v318, %v382
        %v384 = vmul.f32 %v383, %v326
        %v385 = vsub.f32 %v379, %v384
        %v386 = vadd.f32 %v370, %v385
        %v387 = vmul.f32 %v378, %v326
        %v388 = vmul.f32 %v383, %v322
        %v389 = vadd.f32 %v387, %v388
        %v390 = vadd.f32 %v374, %v389
        %391 = vst [vmem:[%s309] sm:$0xf] %v386
        %392 = vst [vmem:[%s316] sm:$0xf] %v390
        %s393 = sand.u32 %s132, 1
        %s394 = scalar_lea.sflag [#allocation4], %s393
        %s395 = sand.u32 %s132, 1
        %s396 = smul.addr %s395, 4
        %s397 = scalar_lea.vmem [#allocation10], %s396
        %s398 = sand.u32 %s158, 1
        %s399 = scalar_lea.sflag [#allocation12], %s398
        %s400 = sand.u32 %s158, 1
        %s401 = smul.addr %s400, 4
        %s402 = scalar_lea.vmem [#allocation11], %s401
        // Predicated region
        $region53: #{tpu_custom_call.1} parent=35 // pred_check
          %p403 = pneg %p142
        $region54: #{tpu_custom_call.1} parent=35 // pred_check_branch
          %405 = sbr.rel (%p403) target = $region56
        $region55: #{tpu_custom_call.1} parent=35 // pred_region
          %s407 = ssub.s32 64, 64
          %408 = vsyncadd %s394, %s407
          %s409 = smul.addr %s30, 64
          %s410 = scalar_lea.hbm %s4, %s409
          %s412 = sshll.u32 %s397, 4
          %s413 = int_to_ptr.vmem [resolvable:$true] %s412
          %415 = dma.vmem_to_hbm [thread:$0]  %s413, 64, %s410, %s394
        $region56: #{tpu_custom_call.1} parent=35 // pred_fallthru
          _
        // Predicated region
        $region57: #{tpu_custom_call.1} parent=35 // pred_check
          %p416 = pneg %p168
        $region58: #{tpu_custom_call.1} parent=35 // pred_check_branch
          %418 = sbr.rel (%p416) target = $region60
        $region59: #{tpu_custom_call.1} parent=35 // pred_region
          %s420 = ssub.s32 64, 64
          %421 = vsyncadd %s399, %s420
          %s422 = smul.addr %s30, 64
          %s423 = scalar_lea.hbm %s5, %s422
          %s425 = sshll.u32 %s402, 4
          %s426 = int_to_ptr.vmem [resolvable:$true] %s425
          %428 = dma.vmem_to_hbm [thread:$0]  %s426, 64, %s423, %s399
        $region60: #{tpu_custom_call.1} parent=35 // pred_fallthru
          _
      $region36: #{tpu_custom_call.1} parent=5 // pred_fallthru
        _
      %p429 = scmp.le.s32.totalorder 2, %s25
      // Predicated region
      $region61: #{tpu_custom_call.1} parent=5 // pred_check
        %p430 = pneg %p429
      $region62: #{tpu_custom_call.1} parent=5 // pred_check_branch
        %432 = sbr.rel (%p430) target = $region64
      $region63: #{tpu_custom_call.1} parent=5 // pred_region
        %s433 = ssub.s32 %s25, 2
        // Predicated region
        $region65: #{tpu_custom_call.1} parent=63 // pred_check
          %p434 = pneg %p148
        $region66: #{tpu_custom_call.1} parent=63 // pred_check_branch
          %436 = sbr.rel (%p434) target = $region68
        $region67: #{tpu_custom_call.1} parent=63 // pred_region
          %s437 = sand.u32 %s133, 1
          %s438 = scalar_lea.sflag [#allocation4], %s437
          %s439 = sand.u32 %s133, 1
          %s440 = smul.addr %s439, 4
          %s441 = scalar_lea.vmem [#allocation10], %s440
          %442 = dma.done %s438, 64
        $region68: #{tpu_custom_call.1} parent=63 // pred_fallthru
          _
        // Predicated region
        $region69: #{tpu_custom_call.1} parent=63 // pred_check
          %p443 = pneg %p174
        $region70: #{tpu_custom_call.1} parent=63 // pred_check_branch
          %445 = sbr.rel (%p443) target = $region72
        $region71: #{tpu_custom_call.1} parent=63 // pred_region
          %s446 = sand.u32 %s159, 1
          %s447 = scalar_lea.sflag [#allocation12], %s446
          %s448 = sand.u32 %s159, 1
          %s449 = smul.addr %s448, 4
          %s450 = scalar_lea.vmem [#allocation11], %s449
          %451 = dma.done %s447, 64
        $region72: #{tpu_custom_call.1} parent=63 // pred_fallthru
          _
      $region64: #{tpu_custom_call.1} parent=5 // pred_fallthru
        _
    $region6: #{tpu_custom_call.1} parent=1 // loop_footer
      %s29 = sadd.s32 1, %s25
    $region7: #{tpu_custom_call.1} parent=1 // loop_footer_branch
      %24 = sbr.rel target = $region3
    $region8: #{tpu_custom_call.1} parent=1 // loop_exit
      _
    %452 = vsyncpa [#allocation3], 1
    %s453 = scalar_lea.sflag [#allocation3], 1
    %454 = vsyncpa %s453, 1
    %455 = vsyncpa [#allocation6], 1
    %s456 = scalar_lea.sflag [#allocation6], 1
    %457 = vsyncpa %s456, 1
    %458 = vsyncpa [#allocation9], 1
    %459 = vsyncpa [#allocation4], 1
    %s460 = scalar_lea.sflag [#allocation4], 1
    %461 = vsyncpa %s460, 1
    %462 = vsyncpa [#allocation12], 1
    %s463 = scalar_lea.sflag [#allocation12], 1
    %464 = vsyncpa %s463, 1

</llo_original>
